<compile_context>
chip_gen: v5e
topology: v5e:2x2
jax: 0.10.0
libtpu: 0.0.40
codegen_flags: <defaults>
</compile_context>

<pallas_src>
import functools

import jax
import jax.numpy as jnp
from jax.experimental import pallas as pl
from jax.experimental.pallas import tpu as pltpu


def _sage_kernel(a_ref,       # (tile_n, tile_k)  bf16  normalized adjacency block
                 x_agg_ref,   # (tile_k, Din)     bf16  X rows for this K block
                 x_self_ref,  # (tile_n, Din)     bf16  this row-tile's own X rows
                 u_ref,       # (tile_n, Dout_p)  f32   dropout uniforms
                 w_self_ref,  # (Din, Dout_p)     bf16
                 w_nbr_ref,   # (Din, Dout_p)     bf16
                 b_ref,       # (1, Dout_p)       f32
                 o_ref,       # (tile_n, Dout_p)  f32
                 acc_ref,     # (tile_n, Din)     f32   x_nbr accumulator
                 *, drop_rate, apply_dropout):
    k = pl.program_id(1)

    @pl.when(k == 0)
    def _():
        acc_ref[...] = jnp.zeros_like(acc_ref)

    # Partial neighbor mean-aggregation on the MXU (bf16 inputs, f32 accum):
    #   acc += A_norm[i-tile, k-tile] @ X[k-tile]
    acc_ref[...] += jnp.dot(a_ref[...], x_agg_ref[...],
                            preferred_element_type=jnp.float32)

    @pl.when(k == pl.num_programs(1) - 1)
    def _():
        x_nbr = acc_ref[...].astype(jnp.bfloat16)            # (tile_n, Din)
        # concat([X, X_nbr]) @ W^T + b  ==  X@W_self + X_nbr@W_nbr + b
        h = (jnp.dot(x_self_ref[...], w_self_ref[...],
                     preferred_element_type=jnp.float32)
             + jnp.dot(x_nbr, w_nbr_ref[...],
                       preferred_element_type=jnp.float32)
             + b_ref[...])
        h = jnp.maximum(h, 0.0)                               # ReLU
        if apply_dropout:                                     # inverted dropout
            keep = u_ref[...] >= jnp.float32(drop_rate)
            h = jnp.where(keep, h * (1.0 / (1.0 - drop_rate)), 0.0)
        o_ref[...] = h.astype(o_ref.dtype)


def graphsage_conv(X, A, deg_inv, W, b, *, drop_rate=0.5, training=True,
                   rng_key=None, tile_n=256, tile_k=512):
    """GraphSAGEConv forward.

    X:       (N, Din)      f32 node features
    A:       (N, N)        f32 dense 0/1 adjacency (row i -> neighbors of i)
    deg_inv: (N, 1)        f32 1/degree (mean aggregation)
    W:       (2*Din, Dout) f32 (transpose of torch Linear weight (Dout, 2*Din))
    b:       (1, Dout)     f32
    """
    N, Din = X.shape
    two_din, Dout = W.shape
    assert two_din == 2 * Din

    if training and float(drop_rate) >= 1.0:
        # torch.nn.Dropout(p=1) zeroes everything; avoids 1/(1-p) div-by-zero.
        return jnp.zeros((N, Dout), jnp.float32)

    tile_n = min(tile_n, N)
    tile_k = min(tile_k, N)
    assert N % tile_n == 0 and N % tile_k == 0, "N must divide into tiles"
    assert (tile_k % 128 == 0) or (tile_k == N)
    assert (tile_n % 8 == 0) or (tile_n == N)

    # Lane-dense output: pad Dout up to a multiple of 128 (sliced off below).
    d_pad = (-Dout) % 128
    Dout_p = Dout + d_pad
    W_self = W[:Din, :]
    W_nbr = W[Din:, :]
    b2 = b.reshape(1, Dout).astype(jnp.float32)
    if d_pad:
        W_self = jnp.pad(W_self, ((0, 0), (0, d_pad)))
        W_nbr = jnp.pad(W_nbr, ((0, 0), (0, d_pad)))
        b2 = jnp.pad(b2, ((0, 0), (0, d_pad)))
    W_self = W_self.astype(jnp.bfloat16)
    W_nbr = W_nbr.astype(jnp.bfloat16)

    # Fold the mean normalization into A; stream the dominant (N, N) operand
    # (and X) in bf16 -> half the HBM bytes and bf16-MXU aggregation.
    A_norm = (A * deg_inv).astype(jnp.bfloat16)
    X_bf = X.astype(jnp.bfloat16)

    apply_dropout = bool(training) and float(drop_rate) > 0.0
    if apply_dropout:
        if rng_key is None:
            rng_key = jax.random.PRNGKey(0)
        u = jax.random.uniform(rng_key, (N, Dout_p), dtype=jnp.float32)
    else:
        u = jnp.ones((N, Dout_p), dtype=jnp.float32)

    kernel = functools.partial(_sage_kernel,
                               drop_rate=float(drop_rate),
                               apply_dropout=apply_dropout)

    grid_spec = pltpu.PrefetchScalarGridSpec(
        num_scalar_prefetch=0,
        grid=(N // tile_n, N // tile_k),
        in_specs=[
            pl.BlockSpec((tile_n, tile_k), lambda i, k: (i, k)),   # A_norm
            pl.BlockSpec((tile_k, Din),    lambda i, k: (k, 0)),   # X (agg rows)
            pl.BlockSpec((tile_n, Din),    lambda i, k: (i, 0)),   # X (self rows)
            pl.BlockSpec((tile_n, Dout_p), lambda i, k: (i, 0)),   # dropout u
            pl.BlockSpec((Din, Dout_p),    lambda i, k: (0, 0)),   # W_self
            pl.BlockSpec((Din, Dout_p),    lambda i, k: (0, 0)),   # W_nbr
            pl.BlockSpec((1, Dout_p),      lambda i, k: (0, 0)),   # bias
        ],
        out_specs=pl.BlockSpec((tile_n, Dout_p), lambda i, k: (i, 0)),
        scratch_shapes=[pltpu.VMEM((tile_n, Din), jnp.float32)],
    )

    # Rough double-buffered VMEM footprint -> explicit scoped-VMEM budget,
    # capped at v7x's 64 MiB physical VMEM.
    est = (2 * tile_n * tile_k * 2 + 2 * tile_k * Din * 2
           + 2 * tile_n * Din * 2 + 2 * tile_n * Dout_p * 4
           + 4 * Din * Dout_p * 2 + 2 * Dout_p * 4
           + 2 * tile_n * Dout_p * 4 + tile_n * Din * 4)
    vmem_limit = int(min(max(2 * est, 32 * 1024 * 1024), 64 * 1024 * 1024))

    out_p = pl.pallas_call(
        kernel,
        out_shape=jax.ShapeDtypeStruct((N, Dout_p), jnp.float32),
        grid_spec=grid_spec,
        compiler_params=pltpu.CompilerParams(
            # Row tiles are independent -> "parallel" (v7x uses both TCs);
            # the K/neighbor axis carries the accumulator -> "arbitrary".
            dimension_semantics=("parallel", "arbitrary"),
            vmem_limit_bytes=vmem_limit,
        ),
    )(A_norm, X_bf, X_bf, u, W_self, W_nbr, b2)

    return out_p[:, :Dout] if d_pad else out_p


if __name__ == "__main__":
    # --- deterministic synthetic setup -----------------------------------
    N, Din, Dout = 128, 32, 64
    drop_rate = 0.5

    key = jax.random.PRNGKey(0)
    kx, ka, kw, kb, kd = jax.random.split(key, 5)

    X = jax.random.normal(kx, (N, Din), dtype=jnp.float32)

    # random binary adjacency, no self loops
    A = (jax.random.uniform(ka, (N, N)) < 0.1).astype(jnp.float32)
    A = A * (1.0 - jnp.eye(N, dtype=jnp.float32))
    deg = jnp.sum(A, axis=1, keepdims=True)
    deg_inv = 1.0 / jnp.maximum(deg, 1.0)          # safe mean aggregation

    # nn.Linear(2*Din, Dout) default init, stored transposed: (2*Din, Dout)
    fan_in = 2 * Din
    bound = 1.0 / jnp.sqrt(jnp.float32(fan_in))
    W = jax.random.uniform(kw, (2 * Din, Dout), minval=-bound, maxval=bound,
                           dtype=jnp.float32)
    b = jax.random.uniform(kb, (1, Dout), minval=-bound, maxval=bound,
                           dtype=jnp.float32)

    # --- training (dropout) path ------------------------------------------
    out_train = jax.block_until_ready(
        graphsage_conv(X, A, deg_inv, W, b,
                       drop_rate=drop_rate, training=True, rng_key=kd))
    assert out_train.shape == (N, Dout) and out_train.dtype == jnp.float32
    assert bool(jnp.all(jnp.isfinite(out_train)))

    # --- eval (deterministic) path vs. plain-JAX reference -----------------
    out_eval = jax.block_until_ready(
        graphsage_conv(X, A, deg_inv, W, b,
                       drop_rate=drop_rate, training=False))

    # Reference on the same bf16-rounded operands the kernel streams.
    A_f = (A * deg_inv).astype(jnp.bfloat16).astype(jnp.float32)
    X_f = X.astype(jnp.bfloat16).astype(jnp.float32)
    Ws_f = W[:Din, :].astype(jnp.bfloat16).astype(jnp.float32)
    Wn_f = W[Din:, :].astype(jnp.bfloat16).astype(jnp.float32)
    hi = jax.lax.Precision.HIGHEST
    x_nbr_ref = jnp.dot(A_f, X_f, precision=hi)
    x_nbr_ref = x_nbr_ref.astype(jnp.bfloat16).astype(jnp.float32)
    ref = jnp.maximum(jnp.dot(X_f, Ws_f, precision=hi)
                      + jnp.dot(x_nbr_ref, Wn_f, precision=hi) + b, 0.0)
    max_err = float(jnp.max(jnp.abs(out_eval - ref)))
    assert bool(jnp.allclose(out_eval, ref, atol=2e-3, rtol=2e-3)), max_err

    # Inverted-dropout consistency: every kept entry equals 1/(1-p) x eval.
    scaled_err = jnp.where(out_train != 0.0,
                           out_train - (1.0 / (1.0 - drop_rate)) * out_eval,
                           0.0)
    assert float(jnp.max(jnp.abs(scaled_err))) < 1e-4

    print("KERNEL_OK")
</pallas_src>

<mosaic_0001>
module attributes {stable_mosaic.version = 11 : i64} {
  func.func @_sage_kernel(%arg0: i32, %arg1: i32, %arg2: memref<128x128xbf16, #tpu.memory_space<vmem>>, %arg3: memref<128x32xbf16, #tpu.memory_space<vmem>>, %arg4: memref<128x32xbf16, #tpu.memory_space<vmem>>, %arg5: memref<128x128xf32, #tpu.memory_space<vmem>>, %arg6: memref<32x128xbf16, #tpu.memory_space<vmem>>, %arg7: memref<32x128xbf16, #tpu.memory_space<vmem>>, %arg8: memref<1x128xf32, #tpu.memory_space<vmem>>, %arg9: memref<128x128xf32, #tpu.memory_space<vmem>>, %arg10: memref<128x32xf32, #tpu.memory_space<vmem>>) attributes {dimension_semantics = [#tpu.dimension_semantics<parallel>, #tpu.dimension_semantics<arbitrary>], iteration_bounds = array<i64: 1, 1>, scalar_prefetch = 0 : i64, scratch_operands = 1 : i64, tpu.core_type = #tpu.core_type<tc>, window_params = [{transform_indices = @transform_0, window_bounds = array<i64: 128, 128>}, {transform_indices = @transform_1, window_bounds = array<i64: 128, 32>}, {transform_indices = @transform_2, window_bounds = array<i64: 128, 32>}, {transform_indices = @transform_3, window_bounds = array<i64: 128, 128>}, {pipeline_mode = #tpu.pipeline_mode<synchronous>, transform_indices = @transform_4, window_bounds = array<i64: 32, 128>}, {pipeline_mode = #tpu.pipeline_mode<synchronous>, transform_indices = @transform_5, window_bounds = array<i64: 32, 128>}, {pipeline_mode = #tpu.pipeline_mode<synchronous>, transform_indices = @transform_6, window_bounds = array<i64: 1, 128>}, {transform_indices = @transform_7, window_bounds = array<i64: 128, 128>}]} {
    %c0_i32 = arith.constant 0 : i32
    %0 = arith.cmpi eq, %arg1, %c0_i32 : i32
    %1 = arith.extui %0 : i1 to i32
    %c0_i32_0 = arith.constant 0 : i32
    %2 = arith.cmpi ne, %1, %c0_i32_0 : i32
    scf.if %2 {
      %cst_10 = arith.constant 0.000000e+00 : f32
      %12 = vector.broadcast %cst_10 : f32 to vector<128x32xf32>
      %c0_11 = arith.constant 0 : index
      %c0_12 = arith.constant 0 : index
      %13 = vector.load %arg10[%c0_11, %c0_12] : memref<128x32xf32, #tpu.memory_space<vmem>>, vector<128x32xf32>
      tpu.vector_store %arg10[%c0_11, %c0_12], %12 {strides = array<i32>} : memref<128x32xf32, #tpu.memory_space<vmem>>, vector<128x32xf32>,
    } else {
    }
    %c0 = arith.constant 0 : index
    %c0_1 = arith.constant 0 : index
    %3 = vector.load %arg10[%c0, %c0_1] : memref<128x32xf32, #tpu.memory_space<vmem>>, vector<128x32xf32>
    %c0_2 = arith.constant 0 : index
    %c0_3 = arith.constant 0 : index
    %4 = vector.load %arg2[%c0_2, %c0_3] : memref<128x128xbf16, #tpu.memory_space<vmem>>, vector<128x128xbf16>
    %c0_4 = arith.constant 0 : index
    %c0_5 = arith.constant 0 : index
    %5 = vector.load %arg3[%c0_4, %c0_5] : memref<128x32xbf16, #tpu.memory_space<vmem>>, vector<128x32xbf16>
    %cst = arith.constant dense<0.000000e+00> : vector<128x32xf32>
    %6 = tpu.matmul %4, %5, %cst {dimension_numbers = #tpu.dot_dimension_numbers<[1], [0], [0], [1], [0, 0, 1, 1], [], []>} : vector<128x128xbf16>, vector<128x32xbf16>, vector<128x32xf32> -> vector<128x32xf32>
    %7 = arith.addf %3, %6 : vector<128x32xf32>
    %c0_6 = arith.constant 0 : index
    %c0_7 = arith.constant 0 : index
    %8 = vector.load %arg10[%c0_6, %c0_7] : memref<128x32xf32, #tpu.memory_space<vmem>>, vector<128x32xf32>
    tpu.vector_store %arg10[%c0_6, %c0_7], %7 {strides = array<i32>} : memref<128x32xf32, #tpu.memory_space<vmem>>, vector<128x32xf32>,
    %c0_i32_8 = arith.constant 0 : i32
    %9 = arith.cmpi eq, %arg1, %c0_i32_8 : i32
    %10 = arith.extui %9 : i1 to i32
    %c0_i32_9 = arith.constant 0 : i32
    %11 = arith.cmpi ne, %10, %c0_i32_9 : i32
    scf.if %11 {
      %c0_10 = arith.constant 0 : index
      %c0_11 = arith.constant 0 : index
      %12 = vector.load %arg10[%c0_10, %c0_11] : memref<128x32xf32, #tpu.memory_space<vmem>>, vector<128x32xf32>
      %13 = arith.truncf %12 : vector<128x32xf32> to vector<128x32xbf16>
      %c0_12 = arith.constant 0 : index
      %c0_13 = arith.constant 0 : index
      %14 = vector.load %arg4[%c0_12, %c0_13] : memref<128x32xbf16, #tpu.memory_space<vmem>>, vector<128x32xbf16>
      %c0_14 = arith.constant 0 : index
      %c0_15 = arith.constant 0 : index
      %15 = vector.load %arg6[%c0_14, %c0_15] : memref<32x128xbf16, #tpu.memory_space<vmem>>, vector<32x128xbf16>
      %cst_16 = arith.constant dense<0.000000e+00> : vector<128x128xf32>
      %16 = tpu.matmul %14, %15, %cst_16 {dimension_numbers = #tpu.dot_dimension_numbers<[1], [0], [0], [1], [0, 0, 1, 1], [], []>} : vector<128x32xbf16>, vector<32x128xbf16>, vector<128x128xf32> -> vector<128x128xf32>
      %c0_17 = arith.constant 0 : index
      %c0_18 = arith.constant 0 : index
      %17 = vector.load %arg7[%c0_17, %c0_18] : memref<32x128xbf16, #tpu.memory_space<vmem>>, vector<32x128xbf16>
      %cst_19 = arith.constant dense<0.000000e+00> : vector<128x128xf32>
      %18 = tpu.matmul %13, %17, %cst_19 {dimension_numbers = #tpu.dot_dimension_numbers<[1], [0], [0], [1], [0, 0, 1, 1], [], []>} : vector<128x32xbf16>, vector<32x128xbf16>, vector<128x128xf32> -> vector<128x128xf32>
      %19 = arith.addf %16, %18 : vector<128x128xf32>
      %c0_20 = arith.constant 0 : index
      %c0_21 = arith.constant 0 : index
      %20 = vector.load %arg8[%c0_20, %c0_21] : memref<1x128xf32, #tpu.memory_space<vmem>>, vector<1x128xf32>
      %21 = vector.broadcast %20 : vector<1x128xf32> to vector<128x128xf32>
      %22 = arith.addf %19, %21 : vector<128x128xf32>
      %cst_22 = arith.constant 0.000000e+00 : f32
      %23 = vector.broadcast %cst_22 : f32 to vector<128x128xf32>
      %24 = arith.maximumf %22, %23 : vector<128x128xf32>
      %c0_23 = arith.constant 0 : index
      %c0_24 = arith.constant 0 : index
      %25 = vector.load %arg5[%c0_23, %c0_24] : memref<128x128xf32, #tpu.memory_space<vmem>>, vector<128x128xf32>
      %cst_25 = arith.constant 5.000000e-01 : f32
      %26 = vector.broadcast %cst_25 : f32 to vector<128x128xf32>
      %27 = arith.cmpf oge, %25, %26 : vector<128x128xf32>
      %cst_26 = arith.constant 2.000000e+00 : f32
      %28 = vector.broadcast %cst_26 : f32 to vector<128x128xf32>
      %29 = arith.mulf %24, %28 : vector<128x128xf32>
      %cst_27 = arith.constant 0.000000e+00 : f32
      %30 = vector.broadcast %cst_27 : f32 to vector<128x128xf32>
      %31 = arith.select %27, %29, %30 : vector<128x128xi1>, vector<128x128xf32>
      %c0_28 = arith.constant 0 : index
      %c0_29 = arith.constant 0 : index
      %32 = vector.load %arg9[%c0_28, %c0_29] : memref<128x128xf32, #tpu.memory_space<vmem>>, vector<128x128xf32>
      tpu.vector_store %arg9[%c0_28, %c0_29], %31 {strides = array<i32>} : memref<128x128xf32, #tpu.memory_space<vmem>>, vector<128x128xf32>,
    } else {
    }
    return
  }
  func.func @transform_0(%arg0: i32, %arg1: i32) -> (i32, i32) {
    %c0_i32 = arith.constant 0 : i32
    return %arg0, %arg1 : i32, i32
  }
  func.func @transform_1(%arg0: i32, %arg1: i32) -> (i32, i32) {
    %c0_i32 = arith.constant 0 : i32
    %c0_i32_0 = arith.constant 0 : i32
    return %arg1, %c0_i32 : i32, i32
  }
  func.func @transform_2(%arg0: i32, %arg1: i32) -> (i32, i32) {
    %c0_i32 = arith.constant 0 : i32
    %c0_i32_0 = arith.constant 0 : i32
    return %arg0, %c0_i32 : i32, i32
  }
  func.func @transform_3(%arg0: i32, %arg1: i32) -> (i32, i32) {
    %c0_i32 = arith.constant 0 : i32
    %c0_i32_0 = arith.constant 0 : i32
    return %arg0, %c0_i32 : i32, i32
  }
  func.func @transform_4(%arg0: i32, %arg1: i32) -> (i32, i32) {
    %c0_i32 = arith.constant 0 : i32
    %c0_i32_0 = arith.constant 0 : i32
    %c0_i32_1 = arith.constant 0 : i32
    return %c0_i32, %c0_i32_0 : i32, i32
  }
  func.func @transform_5(%arg0: i32, %arg1: i32) -> (i32, i32) {
    %c0_i32 = arith.constant 0 : i32
    %c0_i32_0 = arith.constant 0 : i32
    %c0_i32_1 = arith.constant 0 : i32
    return %c0_i32, %c0_i32_0 : i32, i32
  }
  func.func @transform_6(%arg0: i32, %arg1: i32) -> (i32, i32) {
    %c0_i32 = arith.constant 0 : i32
    %c0_i32_0 = arith.constant 0 : i32
    %c0_i32_1 = arith.constant 0 : i32
    return %c0_i32, %c0_i32_0 : i32, i32
  }
  func.func @transform_7(%arg0: i32, %arg1: i32) -> (i32, i32) {
    %c0_i32 = arith.constant 0 : i32
    %c0_i32_0 = arith.constant 0 : i32
    return %arg0, %c0_i32 : i32, i32
  }
}

</mosaic_0001>

<llo_original>
// kernel: tpu_custom_call.1
$region0: #{tpu_custom_call.1}
  #allocation0 [shape = 'u32[]', space=smem, size = 0x4, offset = 0x4, fixed_abs, tag = 'smem constant byte address 0x4 - core index']
  #allocation1 [shape = 'u32[72,128]{1,0:T(1,128)}', space=vmem, size = 0x9000, scoped, tag = 'internal scratch']
  #allocation2 [shape = 'f32[128,32]{1,0:T(8,128)}', space=vmem, size = 0x10000, scoped, tag = 'scratch operand']
  %s0 = inlined_call_operand.hbm [shape: bf16[128,128], index: 0, kind: input, shape index: {}]
  %s1 = inlined_call_operand.vmem [shape: bf16[128,32], index: 1, kind: input, shape index: {}]
  %s2 = inlined_call_operand.vmem [shape: bf16[128,32], index: 2, kind: input, shape index: {}]
  %s3 = inlined_call_operand.vmem [shape: f32[128,128], index: 3, kind: input, shape index: {}]
  %s4 = inlined_call_operand.vmem [shape: bf16[32,128], index: 4, kind: input, shape index: {}]
  %s5 = inlined_call_operand.hbm [shape: bf16[32,128], index: 5, kind: input, shape index: {}]
  %s6 = inlined_call_operand.vmem [shape: f32[1,128], index: 6, kind: input, shape index: {}]
  %s7 = inlined_call_operand.hbm [shape: f32[128,128], index: 7, kind: output, shape index: {}]
  %s8 = sld [smem:[#allocation0]]
  $region54: #{tpu_custom_call.1} parent=0
    _
  %s10 = ssub.s32 1, %s8
  %s11 = scalar_select 0, %s10, %s8
  $region1: #{tpu_custom_call.1} parent=0
    #allocation3 [shape = 'u8[32768]{0}', space=vmem, size = 0x8000, scoped, tag = 'input window, operand 0, single buffered']
    #allocation4 [shape = 's32[1]{0}', space=sflag, size = 0x4, scoped, tag = 'scoped memory for tpu_custom_call.1']
    #allocation5 [shape = 's32[1]{0}', space=sflag, size = 0x4, scoped, tag = 'scoped memory for tpu_custom_call.1']
    #allocation6 [shape = 'u8[8192]{0}', space=vmem, size = 0x2000, scoped, tag = 'input window, operand 5, single buffered']
    #allocation7 [shape = 's32[1]{0}', space=sflag, size = 0x4, scoped, tag = 'scoped memory for tpu_custom_call.1']
    #allocation8 [shape = 'u8[65536]{0}', space=vmem, size = 0x10000, scoped, tag = 'output window, operand 0, single buffered']
    %12 = vsyncpa [#allocation4], 0
    %13 = vsyncpa [#allocation7], 0
    %14 = vsyncpa [#allocation5], 0
    // Predicated region
    $region2: #{tpu_custom_call.1} parent=1 // pred_check
      _
    $region3: #{tpu_custom_call.1} parent=1 // pred_check_branch
      %16 = sbr.rel (0) target = $region5
    $region4: #{tpu_custom_call.1} parent=1 // pred_region
      %18 = vsyncadd [#allocation4], 0
      %s19 = sshll.u32 %s0, 4
      %s20 = int_to_ptr.hbm [resolvable:$true] %s19
      %s21 = sshll.u32 [#allocation3], 4
      %s22 = int_to_ptr.vmem [resolvable:$true] %s21
      %27 = dma.hbm_to_vmem [thread:$0]  %s20, 1024, %s22, [#allocation4], 64, 64, 4
    $region5: #{tpu_custom_call.1} parent=1 // pred_fallthru
      _
    // Predicated region
    $region6: #{tpu_custom_call.1} parent=1 // pred_check
      _
    $region7: #{tpu_custom_call.1} parent=1 // pred_check_branch
      %29 = sbr.rel (0) target = $region9
    $region8: #{tpu_custom_call.1} parent=1 // pred_region
      _
    $region9: #{tpu_custom_call.1} parent=1 // pred_fallthru
      _
    // Predicated region
    $region10: #{tpu_custom_call.1} parent=1 // pred_check
      _
    $region11: #{tpu_custom_call.1} parent=1 // pred_check_branch
      %31 = sbr.rel (0) target = $region13
    $region12: #{tpu_custom_call.1} parent=1 // pred_region
      _
    $region13: #{tpu_custom_call.1} parent=1 // pred_fallthru
      _
    // Predicated region
    $region14: #{tpu_custom_call.1} parent=1 // pred_check
      _
    $region15: #{tpu_custom_call.1} parent=1 // pred_check_branch
      %33 = sbr.rel (0) target = $region17
    $region16: #{tpu_custom_call.1} parent=1 // pred_region
      _
    $region17: #{tpu_custom_call.1} parent=1 // pred_fallthru
      _
    // Predicated region
    $region18: #{tpu_custom_call.1} parent=1 // pred_check
      _
    $region19: #{tpu_custom_call.1} parent=1 // pred_check_branch
      %35 = sbr.rel (0) target = $region21
    $region20: #{tpu_custom_call.1} parent=1 // pred_region
      _
    $region21: #{tpu_custom_call.1} parent=1 // pred_fallthru
      _
    // Predicated region
    $region22: #{tpu_custom_call.1} parent=1 // pred_check
      _
    $region23: #{tpu_custom_call.1} parent=1 // pred_check_branch
      %37 = sbr.rel (0) target = $region25
    $region24: #{tpu_custom_call.1} parent=1 // pred_region
      %39 = vsyncadd [#allocation7], 0
      %s40 = sshll.u32 %s5, 4
      %s41 = int_to_ptr.hbm [resolvable:$true] %s40
      %s42 = sshll.u32 [#allocation6], 4
      %s43 = int_to_ptr.vmem [resolvable:$true] %s42
      %48 = dma.hbm_to_vmem [thread:$0]  %s41, 256, %s43, [#allocation7], 64, 64, 4
    $region25: #{tpu_custom_call.1} parent=1 // pred_fallthru
      _
    // Predicated region
    $region26: #{tpu_custom_call.1} parent=1 // pred_check
      _
    $region27: #{tpu_custom_call.1} parent=1 // pred_check_branch
      %50 = sbr.rel (0) target = $region29
    $region28: #{tpu_custom_call.1} parent=1 // pred_region
      _
    $region29: #{tpu_custom_call.1} parent=1 // pred_fallthru
      _
    // Predicated region
    $region30: #{tpu_custom_call.1} parent=1 // pred_check
      _
    $region31: #{tpu_custom_call.1} parent=1 // pred_check_branch
      %52 = sbr.rel (0) target = $region33
    $region32: #{tpu_custom_call.1} parent=1 // pred_region
      %54 = dma.done [#allocation4], 1024
    $region33: #{tpu_custom_call.1} parent=1 // pred_fallthru
      _
    // Predicated region
    $region34: #{tpu_custom_call.1} parent=1 // pred_check
      _
    $region35: #{tpu_custom_call.1} parent=1 // pred_check_branch
      %56 = sbr.rel (0) target = $region37
    $region36: #{tpu_custom_call.1} parent=1 // pred_region
      %58 = dma.done [#allocation7], 256
    $region37: #{tpu_custom_call.1} parent=1 // pred_fallthru
      _
    %p60 = scmp.eq.s32.totalorder 0, 0
    // Predicated region
    $region38: #{tpu_custom_call.1} parent=1 // pred_check
      %p61 = pneg %p60
    $region39: #{tpu_custom_call.1} parent=1 // pred_check_branch
      %63 = sbr.rel (%p61) target = $region41
    $region40: #{tpu_custom_call.1} parent=1 // pred_region
      %vm64 = vcmask 261120
      %65 = vst.msk [vmem:[#allocation2] sm:$0xff] %vm64, 0.0
      %66 = vst.msk [vmem:[#allocation2 + $0x8] sm:$0xff] %vm64, 0.0
      %67 = vst.msk [vmem:[#allocation2 + $0x10] sm:$0xff] %vm64, 0.0
      %68 = vst.msk [vmem:[#allocation2 + $0x18] sm:$0xff] %vm64, 0.0
      %69 = vst.msk [vmem:[#allocation2 + $0x20] sm:$0xff] %vm64, 0.0
      %70 = vst.msk [vmem:[#allocation2 + $0x28] sm:$0xff] %vm64, 0.0
      %71 = vst.msk [vmem:[#allocation2 + $0x30] sm:$0xff] %vm64, 0.0
      %72 = vst.msk [vmem:[#allocation2 + $0x38] sm:$0xff] %vm64, 0.0
      %73 = vst.msk [vmem:[#allocation2 + $0x40] sm:$0xff] %vm64, 0.0
      %74 = vst.msk [vmem:[#allocation2 + $0x48] sm:$0xff] %vm64, 0.0
      %75 = vst.msk [vmem:[#allocation2 + $0x50] sm:$0xff] %vm64, 0.0
      %76 = vst.msk [vmem:[#allocation2 + $0x58] sm:$0xff] %vm64, 0.0
      %77 = vst.msk [vmem:[#allocation2 + $0x60] sm:$0xff] %vm64, 0.0
      %78 = vst.msk [vmem:[#allocation2 + $0x68] sm:$0xff] %vm64, 0.0
      %79 = vst.msk [vmem:[#allocation2 + $0x70] sm:$0xff] %vm64, 0.0
      %80 = vst.msk [vmem:[#allocation2 + $0x78] sm:$0xff] %vm64, 0.0
    $region41: #{tpu_custom_call.1} parent=1 // pred_fallthru
      _
    %v81 = vld [vmem:[#allocation2] sm:$0xff]
    %v82 = vld [vmem:[#allocation2 + $0x8] sm:$0xff]
    %v83 = vld [vmem:[#allocation2 + $0x10] sm:$0xff]
    %v84 = vld [vmem:[#allocation2 + $0x18] sm:$0xff]
    %v85 = vld [vmem:[#allocation2 + $0x20] sm:$0xff]
    %v86 = vld [vmem:[#allocation2 + $0x28] sm:$0xff]
    %v87 = vld [vmem:[#allocation2 + $0x30] sm:$0xff]
    %v88 = vld [vmem:[#allocation2 + $0x38] sm:$0xff]
    %v89 = vld [vmem:[#allocation2 + $0x40] sm:$0xff]
    %v90 = vld [vmem:[#allocation2 + $0x48] sm:$0xff]
    %v91 = vld [vmem:[#allocation2 + $0x50] sm:$0xff]
    %v92 = vld [vmem:[#allocation2 + $0x58] sm:$0xff]
    %v93 = vld [vmem:[#allocation2 + $0x60] sm:$0xff]
    %v94 = vld [vmem:[#allocation2 + $0x68] sm:$0xff]
    %v95 = vld [vmem:[#allocation2 + $0x70] sm:$0xff]
    %v96 = vld [vmem:[#allocation2 + $0x78] sm:$0xff]
    %v97 = vld [vmem:[#allocation3] sm:$0xf]
    %v98 = vld [vmem:[#allocation3 + $0x4] sm:$0xf]
    %v99 = vld [vmem:[#allocation3 + $0x8] sm:$0xf]
    %v100 = vld [vmem:[#allocation3 + $0xc] sm:$0xf]
    %v101 = vld [vmem:[#allocation3 + $0x10] sm:$0xf]
    %v102 = vld [vmem:[#allocation3 + $0x14] sm:$0xf]
    %v103 = vld [vmem:[#allocation3 + $0x18] sm:$0xf]
    %v104 = vld [vmem:[#allocation3 + $0x1c] sm:$0xf]
    %v105 = vld [vmem:[#allocation3 + $0x20] sm:$0xf]
    %v106 = vld [vmem:[#allocation3 + $0x24] sm:$0xf]
    %v107 = vld [vmem:[#allocation3 + $0x28] sm:$0xf]
    %v108 = vld [vmem:[#allocation3 + $0x2c] sm:$0xf]
    %v109 = vld [vmem:[#allocation3 + $0x30] sm:$0xf]
    %v110 = vld [vmem:[#allocation3 + $0x34] sm:$0xf]
    %v111 = vld [vmem:[#allocation3 + $0x38] sm:$0xf]
    %v112 = vld [vmem:[#allocation3 + $0x3c] sm:$0xf]
    %v113 = vld [vmem:[%s1] sm:$0xf]
    %v114 = vld [vmem:[%s1 + $0x4] sm:$0xf]
    %v115 = vld [vmem:[%s1 + $0x8] sm:$0xf]
    %v116 = vld [vmem:[%s1 + $0xc] sm:$0xf]
    %v117 = vld [vmem:[%s1 + $0x10] sm:$0xf]
    %v118 = vld [vmem:[%s1 + $0x14] sm:$0xf]
    %v119 = vld [vmem:[%s1 + $0x18] sm:$0xf]
    %v120 = vld [vmem:[%s1 + $0x1c] sm:$0xf]
    %v121 = vld [vmem:[%s1 + $0x20] sm:$0xf]
    %v122 = vld [vmem:[%s1 + $0x24] sm:$0xf]
    %v123 = vld [vmem:[%s1 + $0x28] sm:$0xf]
    %v124 = vld [vmem:[%s1 + $0x2c] sm:$0xf]
    %v125 = vld [vmem:[%s1 + $0x30] sm:$0xf]
    %v126 = vld [vmem:[%s1 + $0x34] sm:$0xf]
    %v127 = vld [vmem:[%s1 + $0x38] sm:$0xf]
    %v128 = vld [vmem:[%s1 + $0x3c] sm:$0xf]
    %v145 = vunpack.c.l.b16 %v97
    %v146 = vunpack.c.l.b16 %v98
    %v147 = vunpack.c.l.b16 %v99
    %v148 = vunpack.c.l.b16 %v100
    %v149 = vunpack.c.l.b16 %v101
    %v150 = vunpack.c.l.b16 %v102
    %v151 = vunpack.c.l.b16 %v103
    %v152 = vunpack.c.l.b16 %v104
    %v153 = vunpack.c.l.b16 %v105
    %v154 = vunpack.c.l.b16 %v106
    %v155 = vunpack.c.l.b16 %v107
    %v156 = vunpack.c.l.b16 %v108
    %v157 = vunpack.c.l.b16 %v109
    %v158 = vunpack.c.l.b16 %v110
    %v159 = vunpack.c.l.b16 %v111
    %v160 = vunpack.c.l.b16 %v112
    %v161 = vpack.c.b16 %v146, %v145
    %v162 = vpack.c.b16 %v148, %v147
    %v163 = vpack.c.b16 %v150, %v149
    %v164 = vpack.c.b16 %v152, %v151
    %v165 = vpack.c.b16 %v154, %v153
    %v166 = vpack.c.b16 %v156, %v155
    %v167 = vpack.c.b16 %v158, %v157
    %v168 = vpack.c.b16 %v160, %v159
    %v193 = vunpack.c.l.b16 %v113
    %v194 = vunpack.c.l.b16 %v114
    %v195 = vunpack.c.l.b16 %v115
    %v196 = vunpack.c.l.b16 %v116
    %v197 = vunpack.c.l.b16 %v117
    %v198 = vunpack.c.l.b16 %v118
    %v199 = vunpack.c.l.b16 %v119
    %v200 = vunpack.c.l.b16 %v120
    %v201 = vunpack.c.l.b16 %v121
    %v202 = vunpack.c.l.b16 %v122
    %v203 = vunpack.c.l.b16 %v123
    %v204 = vunpack.c.l.b16 %v124
    %v205 = vunpack.c.l.b16 %v125
    %v206 = vunpack.c.l.b16 %v126
    %v207 = vunpack.c.l.b16 %v127
    %v208 = vunpack.c.l.b16 %v128
    %v209 = vpack.c.b16 %v194, %v193
    %v210 = vpack.c.b16 %v196, %v195
    %v211 = vpack.c.b16 %v198, %v197
    %v212 = vpack.c.b16 %v200, %v199
    %v213 = vpack.c.b16 %v202, %v201
    %v214 = vpack.c.b16 %v204, %v203
    %v215 = vpack.c.b16 %v206, %v205
    %v216 = vpack.c.b16 %v208, %v207
    %225 = vmatpush.bf16.msra.mxu0 %v216
    %226 = vmatpush.bf16.msra.mxu0 %v215
    %227 = vmatpush.bf16.msra.mxu0 %v214
    %228 = vmatpush.bf16.msra.mxu0 %v213
    %229 = vmatpush.bf16.msra.mxu0 %v212
    %230 = vmatpush.bf16.msra.mxu0 %v211
    %231 = vmatpush.bf16.msra.mxu0 %v210
    %232 = vmatpush.bf16.msra.mxu0 %v209
    %233 = vmatmul.bf16.gmra.mxu0 %v161
    %v234 = vpop.f32.mrf.mxu0
    %v235 = vadd.f32 0.0, %v234
    %v236 = vpop.f32.mrf.mxu0
    %v237 = vadd.f32 0.0, %v236
    %238 = vmatmul.bf16.gmra.mxu0 %v162
    %v239 = vpop.f32.mrf.mxu0
    %v240 = vadd.f32 0.0, %v239
    %v241 = vpop.f32.mrf.mxu0
    %v242 = vadd.f32 0.0, %v241
    %243 = vmatmul.bf16.gmra.mxu0 %v163
    %v244 = vpop.f32.mrf.mxu0
    %v245 = vadd.f32 0.0, %v244
    %v246 = vpop.f32.mrf.mxu0
    %v247 = vadd.f32 0.0, %v246
    %248 = vmatmul.bf16.gmra.mxu0 %v164
    %v249 = vpop.f32.mrf.mxu0
    %v250 = vadd.f32 0.0, %v249
    %v251 = vpop.f32.mrf.mxu0
    %v252 = vadd.f32 0.0, %v251
    %253 = vmatmul.bf16.gmra.mxu0 %v165
    %v254 = vpop.f32.mrf.mxu0
    %v255 = vadd.f32 0.0, %v254
    %v256 = vpop.f32.mrf.mxu0
    %v257 = vadd.f32 0.0, %v256
    %258 = vmatmul.bf16.gmra.mxu0 %v166
    %v259 = vpop.f32.mrf.mxu0
    %v260 = vadd.f32 0.0, %v259
    %v261 = vpop.f32.mrf.mxu0
    %v262 = vadd.f32 0.0, %v261
    %263 = vmatmul.bf16.gmra.mxu0 %v167
    %v264 = vpop.f32.mrf.mxu0
    %v265 = vadd.f32 0.0, %v264
    %v266 = vpop.f32.mrf.mxu0
    %v267 = vadd.f32 0.0, %v266
    %268 = vmatmul.bf16.gmra.mxu0 %v168
    %v269 = vpop.f32.mrf.mxu0
    %v270 = vadd.f32 0.0, %v269
    %v271 = vpop.f32.mrf.mxu0
    %v272 = vadd.f32 0.0, %v271
    %273 = vdwg.mxu0
    %v274 = vadd.f32 %v81, %v235
    %v275 = vadd.f32 %v82, %v237
    %v276 = vadd.f32 %v83, %v240
    %v277 = vadd.f32 %v84, %v242
    %v278 = vadd.f32 %v85, %v245
    %v279 = vadd.f32 %v86, %v247
    %v280 = vadd.f32 %v87, %v250
    %v281 = vadd.f32 %v88, %v252
    %v282 = vadd.f32 %v89, %v255
    %v283 = vadd.f32 %v90, %v257
    %v284 = vadd.f32 %v91, %v260
    %v285 = vadd.f32 %v92, %v262
    %v286 = vadd.f32 %v93, %v265
    %v287 = vadd.f32 %v94, %v267
    %v288 = vadd.f32 %v95, %v270
    %v289 = vadd.f32 %v96, %v272
    %vm290 = vcmask 261120
    %291 = vst.msk [vmem:[#allocation2] sm:$0xff] %vm290, %v274
    %292 = vst.msk [vmem:[#allocation2 + $0x8] sm:$0xff] %vm290, %v275
    %293 = vst.msk [vmem:[#allocation2 + $0x10] sm:$0xff] %vm290, %v276
    %294 = vst.msk [vmem:[#allocation2 + $0x18] sm:$0xff] %vm290, %v277
    %295 = vst.msk [vmem:[#allocation2 + $0x20] sm:$0xff] %vm290, %v278
    %296 = vst.msk [vmem:[#allocation2 + $0x28] sm:$0xff] %vm290, %v279
    %297 = vst.msk [vmem:[#allocation2 + $0x30] sm:$0xff] %vm290, %v280
    %298 = vst.msk [vmem:[#allocation2 + $0x38] sm:$0xff] %vm290, %v281
    %299 = vst.msk [vmem:[#allocation2 + $0x40] sm:$0xff] %vm290, %v282
    %300 = vst.msk [vmem:[#allocation2 + $0x48] sm:$0xff] %vm290, %v283
    %301 = vst.msk [vmem:[#allocation2 + $0x50] sm:$0xff] %vm290, %v284
    %302 = vst.msk [vmem:[#allocation2 + $0x58] sm:$0xff] %vm290, %v285
    %303 = vst.msk [vmem:[#allocation2 + $0x60] sm:$0xff] %vm290, %v286
    %304 = vst.msk [vmem:[#allocation2 + $0x68] sm:$0xff] %vm290, %v287
    %305 = vst.msk [vmem:[#allocation2 + $0x70] sm:$0xff] %vm290, %v288
    %306 = vst.msk [vmem:[#allocation2 + $0x78] sm:$0xff] %vm290, %v289
    // Predicated region
    $region42: #{tpu_custom_call.1} parent=1 // pred_check
      %p307 = pneg %p60
    $region43: #{tpu_custom_call.1} parent=1 // pred_check_branch
      %309 = sbr.rel (%p307) target = $region45
    $region44: #{tpu_custom_call.1} parent=1 // pred_region
      %v310 = vld [vmem:[#allocation2] sm:$0xff]
      %v311 = vld [vmem:[#allocation2 + $0x8] sm:$0xff]
      %v312 = vld [vmem:[#allocation2 + $0x10] sm:$0xff]
      %v313 = vld [vmem:[#allocation2 + $0x18] sm:$0xff]
      %v314 = vld [vmem:[#allocation2 + $0x20] sm:$0xff]
      %v315 = vld [vmem:[#allocation2 + $0x28] sm:$0xff]
      %v316 = vld [vmem:[#allocation2 + $0x30] sm:$0xff]
      %v317 = vld [vmem:[#allocation2 + $0x38] sm:$0xff]
      %v318 = vld [vmem:[#allocation2 + $0x40] sm:$0xff]
      %v319 = vld [vmem:[#allocation2 + $0x48] sm:$0xff]
      %v320 = vld [vmem:[#allocation2 + $0x50] sm:$0xff]
      %v321 = vld [vmem:[#allocation2 + $0x58] sm:$0xff]
      %v322 = vld [vmem:[#allocation2 + $0x60] sm:$0xff]
      %v323 = vld [vmem:[#allocation2 + $0x68] sm:$0xff]
      %v324 = vld [vmem:[#allocation2 + $0x70] sm:$0xff]
      %v325 = vld [vmem:[#allocation2 + $0x78] sm:$0xff]
      %v326 = vpack.c.bf16 %v311, %v310
      %v327 = vpack.c.bf16 %v313, %v312
      %v328 = vpack.c.bf16 %v315, %v314
      %v329 = vpack.c.bf16 %v317, %v316
      %v330 = vpack.c.bf16 %v319, %v318
      %v331 = vpack.c.bf16 %v321, %v320
      %v332 = vpack.c.bf16 %v323, %v322
      %v333 = vpack.c.bf16 %v325, %v324
      %v334 = vld [vmem:[%s2] sm:$0xf]
      %v335 = vld [vmem:[%s2 + $0x4] sm:$0xf]
      %v336 = vld [vmem:[%s2 + $0x8] sm:$0xf]
      %v337 = vld [vmem:[%s2 + $0xc] sm:$0xf]
      %v338 = vld [vmem:[%s2 + $0x10] sm:$0xf]
      %v339 = vld [vmem:[%s2 + $0x14] sm:$0xf]
      %v340 = vld [vmem:[%s2 + $0x18] sm:$0xf]
      %v341 = vld [vmem:[%s2 + $0x1c] sm:$0xf]
      %v342 = vld [vmem:[%s2 + $0x20] sm:$0xf]
      %v343 = vld [vmem:[%s2 + $0x24] sm:$0xf]
      %v344 = vld [vmem:[%s2 + $0x28] sm:$0xf]
      %v345 = vld [vmem:[%s2 + $0x2c] sm:$0xf]
      %v346 = vld [vmem:[%s2 + $0x30] sm:$0xf]
      %v347 = vld [vmem:[%s2 + $0x34] sm:$0xf]
      %v348 = vld [vmem:[%s2 + $0x38] sm:$0xf]
      %v349 = vld [vmem:[%s2 + $0x3c] sm:$0xf]
      %v350 = vld [vmem:[%s4] sm:$0xf]
      %v351 = vld [vmem:[%s4 + $0x4] sm:$0xf]
      %v352 = vld [vmem:[%s4 + $0x8] sm:$0xf]
      %v353 = vld [vmem:[%s4 + $0xc] sm:$0xf]
      %v354 = vld [vmem:[#allocation6] sm:$0xf]
      %v355 = vld [vmem:[#allocation6 + $0x4] sm:$0xf]
      %v356 = vld [vmem:[#allocation6 + $0x8] sm:$0xf]
      %v357 = vld [vmem:[#allocation6 + $0xc] sm:$0xf]
      %v362 = vunpack.c.l.b16 %v354
      %v363 = vunpack.c.l.b16 %v355
      %v364 = vunpack.c.l.b16 %v356
      %v365 = vunpack.c.l.b16 %v357
      %v366 = vpack.c.b16 %v363, %v362
      %v367 = vpack.c.b16 %v365, %v364
      %v371 = vsel %vm290, %v326, 0
      %v374 = vsel %vm290, %v327, 0
      %v377 = vsel %vm290, %v328, 0
      %v380 = vsel %vm290, %v329, 0
      %v383 = vsel %vm290, %v330, 0
      %v386 = vsel %vm290, %v331, 0
      %v389 = vsel %vm290, %v332, 0
      %v392 = vsel %vm290, %v333, 0
      %394 = vmatpush.bf16.msra.mxu0 0
      %395 = vmatpush.bf16.msra.mxu0 0
      %396 = vmatpush.bf16.msra.mxu0 0
      %397 = vmatpush.bf16.msra.mxu0 0
      %398 = vmatpush.bf16.msra.mxu0 0
      %399 = vmatpush.bf16.msra.mxu0 0
      %400 = vmatpush.bf16.msra.mxu0 %v367
      %401 = vmatpush.bf16.msra.mxu0 %v366
      %402 = vmatmul.bf16.gmra.mxu0 %v371
      %v403 = vpop.f32.mrf.mxu0
      %v404 = vadd.f32 0.0, %v403
      %v405 = vpop.f32.mrf.mxu0
      %v406 = vadd.f32 0.0, %v405
      %407 = vmatmul.bf16.gmra.mxu0 %v374
      %v408 = vpop.f32.mrf.mxu0
      %v409 = vadd.f32 0.0, %v408
      %v410 = vpop.f32.mrf.mxu0
      %v411 = vadd.f32 0.0, %v410
      %412 = vmatmul.bf16.gmra.mxu0 %v377
      %v413 = vpop.f32.mrf.mxu0
      %v414 = vadd.f32 0.0, %v413
      %v415 = vpop.f32.mrf.mxu0
      %v416 = vadd.f32 0.0, %v415
      %417 = vmatmul.bf16.gmra.mxu0 %v380
      %v418 = vpop.f32.mrf.mxu0
      %v419 = vadd.f32 0.0, %v418
      %v420 = vpop.f32.mrf.mxu0
      %v421 = vadd.f32 0.0, %v420
      %422 = vmatmul.bf16.gmra.mxu0 %v383
      %v423 = vpop.f32.mrf.mxu0
      %v424 = vadd.f32 0.0, %v423
      %v425 = vpop.f32.mrf.mxu0
      %v426 = vadd.f32 0.0, %v425
      %427 = vmatmul.bf16.gmra.mxu0 %v386
      %v428 = vpop.f32.mrf.mxu0
      %v429 = vadd.f32 0.0, %v428
      %v430 = vpop.f32.mrf.mxu0
      %v431 = vadd.f32 0.0, %v430
      %432 = vmatmul.bf16.gmra.mxu0 %v389
      %v433 = vpop.f32.mrf.mxu0
      %v434 = vadd.f32 0.0, %v433
      %v435 = vpop.f32.mrf.mxu0
      %v436 = vadd.f32 0.0, %v435
      %437 = vmatmul.bf16.gmra.mxu0 %v392
      %v438 = vpop.f32.mrf.mxu0
      %v439 = vadd.f32 0.0, %v438
      %v440 = vpop.f32.mrf.mxu0
      %v441 = vadd.f32 0.0, %v440
      %442 = vdwg.mxu0
      %v459 = vunpack.c.l.b16 %v334
      %v460 = vunpack.c.l.b16 %v335
      %v461 = vunpack.c.l.b16 %v336
      %v462 = vunpack.c.l.b16 %v337
      %v463 = vunpack.c.l.b16 %v338
      %v464 = vunpack.c.l.b16 %v339
      %v465 = vunpack.c.l.b16 %v340
      %v466 = vunpack.c.l.b16 %v341
      %v467 = vunpack.c.l.b16 %v342
      %v468 = vunpack.c.l.b16 %v343
      %v469 = vunpack.c.l.b16 %v344
      %v470 = vunpack.c.l.b16 %v345
      %v471 = vunpack.c.l.b16 %v346
      %v472 = vunpack.c.l.b16 %v347
      %v473 = vunpack.c.l.b16 %v348
      %v474 = vunpack.c.l.b16 %v349
      %v475 = vpack.c.b16 %v460, %v459
      %v476 = vpack.c.b16 %v462, %v461
      %v477 = vpack.c.b16 %v464, %v463
      %v478 = vpack.c.b16 %v466, %v465
      %v479 = vpack.c.b16 %v468, %v467
      %v480 = vpack.c.b16 %v470, %v469
      %v481 = vpack.c.b16 %v472, %v471
      %v482 = vpack.c.b16 %v474, %v473
      %v487 = vunpack.c.l.b16 %v350
      %v488 = vunpack.c.l.b16 %v351
      %v489 = vunpack.c.l.b16 %v352
      %v490 = vunpack.c.l.b16 %v353
      %v491 = vpack.c.b16 %v488, %v487
      %v492 = vpack.c.b16 %v490, %v489
      %v496 = vsel %vm290, %v475, 0
      %v499 = vsel %vm290, %v476, 0
      %v502 = vsel %vm290, %v477, 0
      %v505 = vsel %vm290, %v478, 0
      %v508 = vsel %vm290, %v479, 0
      %v511 = vsel %vm290, %v480, 0
      %v514 = vsel %vm290, %v481, 0
      %v517 = vsel %vm290, %v482, 0
      %519 = vmatpush.bf16.msra.mxu0 0
      %520 = vmatpush.bf16.msra.mxu0 0
      %521 = vmatpush.bf16.msra.mxu0 0
      %522 = vmatpush.bf16.msra.mxu0 0
      %523 = vmatpush.bf16.msra.mxu0 0
      %524 = vmatpush.bf16.msra.mxu0 0
      %525 = vmatpush.bf16.msra.mxu0 %v492
      %526 = vmatpush.bf16.msra.mxu0 %v491
      %527 = vmatmul.bf16.gmra.mxu0 %v496
      %v528 = vpop.f32.mrf.mxu0
      %v529 = vadd.f32 %v404, %v528
      %v530 = vpop.f32.mrf.mxu0
      %v531 = vadd.f32 %v406, %v530
      %532 = vmatmul.bf16.gmra.mxu0 %v499
      %v533 = vpop.f32.mrf.mxu0
      %v534 = vadd.f32 %v409, %v533
      %v535 = vpop.f32.mrf.mxu0
      %v536 = vadd.f32 %v411, %v535
      %537 = vmatmul.bf16.gmra.mxu0 %v502
      %v538 = vpop.f32.mrf.mxu0
      %v539 = vadd.f32 %v414, %v538
      %v540 = vpop.f32.mrf.mxu0
      %v541 = vadd.f32 %v416, %v540
      %542 = vmatmul.bf16.gmra.mxu0 %v505
      %v543 = vpop.f32.mrf.mxu0
      %v544 = vadd.f32 %v419, %v543
      %v545 = vpop.f32.mrf.mxu0
      %v546 = vadd.f32 %v421, %v545
      %547 = vmatmul.bf16.gmra.mxu0 %v508
      %v548 = vpop.f32.mrf.mxu0
      %v549 = vadd.f32 %v424, %v548
      %v550 = vpop.f32.mrf.mxu0
      %v551 = vadd.f32 %v426, %v550
      %552 = vmatmul.bf16.gmra.mxu0 %v511
      %v553 = vpop.f32.mrf.mxu0
      %v554 = vadd.f32 %v429, %v553
      %v555 = vpop.f32.mrf.mxu0
      %v556 = vadd.f32 %v431, %v555
      %557 = vmatmul.bf16.gmra.mxu0 %v514
      %v558 = vpop.f32.mrf.mxu0
      %v559 = vadd.f32 %v434, %v558
      %v560 = vpop.f32.mrf.mxu0
      %v561 = vadd.f32 %v436, %v560
      %562 = vmatmul.bf16.gmra.mxu0 %v517
      %v563 = vpop.f32.mrf.mxu0
      %v564 = vadd.f32 %v439, %v563
      %v565 = vpop.f32.mrf.mxu0
      %v566 = vadd.f32 %v441, %v565
      %567 = vdwg.mxu0
      %v568 = vld [vmem:[%s6] sm:$0x1]
      %v570 = vperm.slane %v568, 0
      %v572 = vadd.f32 %v529, %v570
      %v573 = vadd.f32 %v531, %v570
      %v574 = vadd.f32 %v534, %v570
      %v575 = vadd.f32 %v536, %v570
      %v576 = vadd.f32 %v539, %v570
      %v577 = vadd.f32 %v541, %v570
      %v578 = vadd.f32 %v544, %v570
      %v579 = vadd.f32 %v546, %v570
      %v580 = vadd.f32 %v549, %v570
      %v581 = vadd.f32 %v551, %v570
      %v582 = vadd.f32 %v554, %v570
      %v583 = vadd.f32 %v556, %v570
      %v584 = vadd.f32 %v559, %v570
      %v585 = vadd.f32 %v561, %v570
      %v586 = vadd.f32 %v564, %v570
      %v587 = vadd.f32 %v566, %v570
      %v588 = vmax.f32 %v572, 0.0
      %v589 = vmax.f32 %v573, 0.0
      %v590 = vmax.f32 %v574, 0.0
      %v591 = vmax.f32 %v575, 0.0
      %v592 = vmax.f32 %v576, 0.0
      %v593 = vmax.f32 %v577, 0.0
      %v594 = vmax.f32 %v578, 0.0
      %v595 = vmax.f32 %v579, 0.0
      %v596 = vmax.f32 %v580, 0.0
      %v597 = vmax.f32 %v581, 0.0
      %v598 = vmax.f32 %v582, 0.0
      %v599 = vmax.f32 %v583, 0.0
      %v600 = vmax.f32 %v584, 0.0
      %v601 = vmax.f32 %v585, 0.0
      %v602 = vmax.f32 %v586, 0.0
      %v603 = vmax.f32 %v587, 0.0
      %v604 = vld [vmem:[%s3] sm:$0xff]
      %v605 = vld [vmem:[%s3 + $0x8] sm:$0xff]
      %v606 = vld [vmem:[%s3 + $0x10] sm:$0xff]
      %v607 = vld [vmem:[%s3 + $0x18] sm:$0xff]
      %v608 = vld [vmem:[%s3 + $0x20] sm:$0xff]
      %v609 = vld [vmem:[%s3 + $0x28] sm:$0xff]
      %v610 = vld [vmem:[%s3 + $0x30] sm:$0xff]
      %v611 = vld [vmem:[%s3 + $0x38] sm:$0xff]
      %v612 = vld [vmem:[%s3 + $0x40] sm:$0xff]
      %v613 = vld [vmem:[%s3 + $0x48] sm:$0xff]
      %v614 = vld [vmem:[%s3 + $0x50] sm:$0xff]
      %v615 = vld [vmem:[%s3 + $0x58] sm:$0xff]
      %v616 = vld [vmem:[%s3 + $0x60] sm:$0xff]
      %v617 = vld [vmem:[%s3 + $0x68] sm:$0xff]
      %v618 = vld [vmem:[%s3 + $0x70] sm:$0xff]
      %v619 = vld [vmem:[%s3 + $0x78] sm:$0xff]
      %vm620 = vcmp.ge.f32.partialorder %v604, 0.5
      %vm621 = vcmp.ge.f32.partialorder %v605, 0.5
      %vm622 = vcmp.ge.f32.partialorder %v606, 0.5
      %vm623 = vcmp.ge.f32.partialorder %v607, 0.5
      %vm624 = vcmp.ge.f32.partialorder %v608, 0.5
      %vm625 = vcmp.ge.f32.partialorder %v609, 0.5
      %vm626 = vcmp.ge.f32.partialorder %v610, 0.5
      %vm627 = vcmp.ge.f32.partialorder %v611, 0.5
      %vm628 = vcmp.ge.f32.partialorder %v612, 0.5
      %vm629 = vcmp.ge.f32.partialorder %v613, 0.5
      %vm630 = vcmp.ge.f32.partialorder %v614, 0.5
      %vm631 = vcmp.ge.f32.partialorder %v615, 0.5
      %vm632 = vcmp.ge.f32.partialorder %v616, 0.5
      %vm633 = vcmp.ge.f32.partialorder %v617, 0.5
      %vm634 = vcmp.ge.f32.partialorder %v618, 0.5
      %vm635 = vcmp.ge.f32.partialorder %v619, 0.5
      %v636 = vmul.f32 %v588, 2.0
      %v637 = vmul.f32 %v589, 2.0
      %v638 = vmul.f32 %v590, 2.0
      %v639 = vmul.f32 %v591, 2.0
      %v640 = vmul.f32 %v592, 2.0
      %v641 = vmul.f32 %v593, 2.0
      %v642 = vmul.f32 %v594, 2.0
      %v643 = vmul.f32 %v595, 2.0
      %v644 = vmul.f32 %v596, 2.0
      %v645 = vmul.f32 %v597, 2.0
      %v646 = vmul.f32 %v598, 2.0
      %v647 = vmul.f32 %v599, 2.0
      %v648 = vmul.f32 %v600, 2.0
      %v649 = vmul.f32 %v601, 2.0
      %v650 = vmul.f32 %v602, 2.0
      %v651 = vmul.f32 %v603, 2.0
      %v652 = vsel %vm620, %v636, 0.0
      %v653 = vsel %vm621, %v637, 0.0
      %v654 = vsel %vm622, %v638, 0.0
      %v655 = vsel %vm623, %v639, 0.0
      %v656 = vsel %vm624, %v640, 0.0
      %v657 = vsel %vm625, %v641, 0.0
      %v658 = vsel %vm626, %v642, 0.0
      %v659 = vsel %vm627, %v643, 0.0
      %v660 = vsel %vm628, %v644, 0.0
      %v661 = vsel %vm629, %v645, 0.0
      %v662 = vsel %vm630, %v646, 0.0
      %v663 = vsel %vm631, %v647, 0.0
      %v664 = vsel %vm632, %v648, 0.0
      %v665 = vsel %vm633, %v649, 0.0
      %v666 = vsel %vm634, %v650, 0.0
      %v667 = vsel %vm635, %v651, 0.0
      %668 = vst [vmem:[#allocation8] sm:$0xff] %v652
      %669 = vst [vmem:[#allocation8 + $0x8] sm:$0xff] %v653
      %670 = vst [vmem:[#allocation8 + $0x10] sm:$0xff] %v654
      %671 = vst [vmem:[#allocation8 + $0x18] sm:$0xff] %v655
      %672 = vst [vmem:[#allocation8 + $0x20] sm:$0xff] %v656
      %673 = vst [vmem:[#allocation8 + $0x28] sm:$0xff] %v657
      %674 = vst [vmem:[#allocation8 + $0x30] sm:$0xff] %v658
      %675 = vst [vmem:[#allocation8 + $0x38] sm:$0xff] %v659
      %676 = vst [vmem:[#allocation8 + $0x40] sm:$0xff] %v660
      %677 = vst [vmem:[#allocation8 + $0x48] sm:$0xff] %v661
      %678 = vst [vmem:[#allocation8 + $0x50] sm:$0xff] %v662
      %679 = vst [vmem:[#allocation8 + $0x58] sm:$0xff] %v663
      %680 = vst [vmem:[#allocation8 + $0x60] sm:$0xff] %v664
      %681 = vst [vmem:[#allocation8 + $0x68] sm:$0xff] %v665
      %682 = vst [vmem:[#allocation8 + $0x70] sm:$0xff] %v666
      %683 = vst [vmem:[#allocation8 + $0x78] sm:$0xff] %v667
    $region45: #{tpu_custom_call.1} parent=1 // pred_fallthru
      _
    // Predicated region
    $region46: #{tpu_custom_call.1} parent=1 // pred_check
      _
    $region47: #{tpu_custom_call.1} parent=1 // pred_check_branch
      %685 = sbr.rel (0) target = $region49
    $region48: #{tpu_custom_call.1} parent=1 // pred_region
      %687 = vsyncadd [#allocation5], 0
      %s688 = sshll.u32 [#allocation8], 4
      %s689 = int_to_ptr.vmem [resolvable:$true] %s688
      %s690 = sshll.u32 %s7, 4
      %s691 = int_to_ptr.hbm [resolvable:$true] %s690
      %696 = dma.vmem_to_hbm [thread:$0]  %s689, 2048, %s691, [#allocation5], 128, 128, 8
    $region49: #{tpu_custom_call.1} parent=1 // pred_fallthru
      _
    // Predicated region
    $region50: #{tpu_custom_call.1} parent=1 // pred_check
      _
    $region51: #{tpu_custom_call.1} parent=1 // pred_check_branch
      %698 = sbr.rel (0) target = $region53
    $region52: #{tpu_custom_call.1} parent=1 // pred_region
      %700 = dma.done [#allocation5], 2048
    $region53: #{tpu_custom_call.1} parent=1 // pred_fallthru
      _
    %701 = vsyncpa [#allocation4], 1
    %702 = vsyncpa [#allocation7], 1
    %703 = vsyncpa [#allocation5], 1

</llo_original>
